<compile_context>
chip_gen: v5e
topology: v5e:2x2
jax: 0.10.0
libtpu: 0.0.40
codegen_flags: <defaults>
</compile_context>

<pallas_src>
import functools

import jax
import jax.numpy as jnp
from jax.experimental import pallas as pl
from jax.experimental.pallas import tpu as pltpu


# ---------------------------------------------------------------------------
# Pass 1: global average pool + 1x1 conv + sigmoid -> per-image attention
# ---------------------------------------------------------------------------
def _fsm_atten_kernel(x_ref, w_att_ref, att_ref, acc_ref, *, hw):
    # x_ref:     (1, C1, tHW)  pixel tile of one image (channels on sublanes)
    # w_att_ref: (C1, C1)      conv_atten weight (out, in)
    # att_ref:   (1, C1, 1)    output: sigmoid(conv_atten(avg_pool(x))), f32
    # acc_ref:   (C1, 1) f32   running per-channel pixel-sum accumulator
    t = pl.program_id(1)

    @pl.when(t == 0)
    def _init():
        acc_ref[...] = jnp.zeros_like(acc_ref)

    x = x_ref[0]                                           # (C1, tHW), storage dtype
    ones = jnp.ones((x.shape[1], 1), dtype=x.dtype)
    # Pixel-sum on the MXU (otherwise-idle slot) instead of a lane reduction.
    acc_ref[...] += jnp.dot(x, ones, preferred_element_type=jnp.float32)

    @pl.when(t == pl.num_programs(1) - 1)
    def _finalize():
        pooled = acc_ref[...] * (1.0 / hw)                 # (C1, 1) global average
        logits = jnp.dot(w_att_ref[...].astype(jnp.float32), pooled,
                         preferred_element_type=jnp.float32)
        att_ref[0] = jax.nn.sigmoid(logits)                # (C1, 1)


# ---------------------------------------------------------------------------
# Pass 2: out = (w_conv * (1 + atten)) @ x     (attention folded into weight)
# ---------------------------------------------------------------------------
def _fsm_conv_kernel(att_ref, w_ref, x_ref, o_ref):
    # att_ref: (1, 1, C1) f32 ; w_ref: (C2, C1) ; x_ref: (1, C1, tHW)
    # o_ref:   (1, C2, tHW)
    # conv(x + x*a) == (w * (1+a)) @ x : a C2*C1 elementwise op per tile
    # instead of scaling the whole activation tile.
    scale = 1.0 + att_ref[0]                               # (1, C1), f32
    w_eff = (w_ref[...].astype(jnp.float32) * scale).astype(x_ref.dtype)
    out = jnp.dot(w_eff, x_ref[0], preferred_element_type=jnp.float32)
    o_ref[0] = out.astype(o_ref.dtype)


# ---------------------------------------------------------------------------
# Tiling helpers
# ---------------------------------------------------------------------------
def _pick_hw_tile(hw, bytes_per_pixel, max_pixels=2048, vmem_cap_bytes=16 << 20):
    """Largest pixel tile that divides hw, is lane aligned (multiple of 256
    preferred for the v6e MXU, else 128) and keeps the double-buffered working
    set modest (v7x-safe). Falls back to the whole image for small/odd sizes."""
    cap = min(max_pixels, max(128, vmem_cap_bytes // max(int(bytes_per_pixel), 1)))
    for align in (256, 128):
        if hw % align != 0:
            continue
        best = 0
        m = 1
        while m * align <= min(hw, cap):
            cand = m * align
            if hw % cand == 0:
                best = cand
            m += 1
        if best:
            return best
    return hw  # small / odd spatial sizes: one tile per image


def _scoped_vmem_bytes(*buf_bytes):
    # double-buffered pipeline buffers + slack, clamped to a generation-safe
    # range (v7x physical VMEM is 64 MiB).
    need = 2 * sum(int(b) for b in buf_bytes) + (8 << 20)
    return int(min(max(need, 32 << 20), 60 << 20))


# ---------------------------------------------------------------------------
# Forward wrapper
# ---------------------------------------------------------------------------
def fsm_forward(x_nchw, w_atten, w_conv):
    """x_nchw: (N, C1, H, W); w_atten: (C1, C1); w_conv: (C2, C1).
    Returns (N, C2, H, W), matching the PyTorch FSM forward."""
    n, c1, h, w = x_nchw.shape
    c2 = w_conv.shape[0]
    hw = h * w
    in_b = x_nchw.dtype.itemsize
    out_b = in_b
    w_b = jnp.dtype(w_conv.dtype).itemsize

    # NCHW-native: contiguous view, no HBM transpose pass on either side.
    x_flat = x_nchw.reshape(n, c1, hw)

    t_hw = _pick_hw_tile(hw, bytes_per_pixel=2 * (c1 * in_b + c2 * out_b))
    num_t = hw // t_hw

    # ---- pass 1: per-image channel attention ------------------------------
    att_col = pl.pallas_call(
        functools.partial(_fsm_atten_kernel, hw=hw),
        out_shape=jax.ShapeDtypeStruct((n, c1, 1), jnp.float32),
        grid_spec=pltpu.PrefetchScalarGridSpec(
            num_scalar_prefetch=0,
            grid=(n, num_t),
            in_specs=[
                pl.BlockSpec((1, c1, t_hw), lambda i, t: (i, 0, t)),
                pl.BlockSpec((c1, c1), lambda i, t: (0, 0)),
            ],
            out_specs=pl.BlockSpec((1, c1, 1), lambda i, t: (i, 0, 0)),
            scratch_shapes=[pltpu.VMEM((c1, 1), jnp.float32)],
        ),
        compiler_params=pltpu.CompilerParams(
            dimension_semantics=("parallel", "arbitrary"),
            vmem_limit_bytes=_scoped_vmem_bytes(c1 * t_hw * in_b,
                                                c1 * c1 * w_b),
        ),
        cost_estimate=pl.CostEstimate(
            flops=2 * n * hw * c1 + 2 * n * c1 * c1,
            transcendentals=n * c1,
            bytes_accessed=n * c1 * hw * in_b + c1 * c1 * w_b + n * c1 * 4,
        ),
    )(x_flat, w_atten)

    # Tiny (N, C1) layout flip so the attention lives on the lane axis inside
    # the main kernel (lets the fold broadcast over the C2 sublanes of w_conv).
    att_row = jnp.transpose(att_col, (0, 2, 1))            # (N, 1, C1), f32

    # ---- pass 2: fused (weight-folded) 1x1 conv over pixel tiles -----------
    out_flat = pl.pallas_call(
        _fsm_conv_kernel,
        out_shape=jax.ShapeDtypeStruct((n, c2, hw), x_nchw.dtype),
        grid_spec=pltpu.PrefetchScalarGridSpec(
            num_scalar_prefetch=0,
            grid=(n, num_t),
            in_specs=[
                pl.BlockSpec((1, 1, c1), lambda i, t: (i, 0, 0)),
                pl.BlockSpec((c2, c1), lambda i, t: (0, 0)),
                pl.BlockSpec((1, c1, t_hw), lambda i, t: (i, 0, t)),
            ],
            out_specs=pl.BlockSpec((1, c2, t_hw), lambda i, t: (i, 0, t)),
        ),
        compiler_params=pltpu.CompilerParams(
            dimension_semantics=("parallel", "parallel"),
            vmem_limit_bytes=_scoped_vmem_bytes(c1 * t_hw * in_b,
                                                c2 * t_hw * out_b,
                                                c2 * c1 * w_b),
        ),
        cost_estimate=pl.CostEstimate(
            flops=2 * n * hw * c1 * c2,
            transcendentals=0,
            bytes_accessed=(n * c1 * hw * in_b + n * c2 * hw * out_b
                            + c2 * c1 * w_b + n * c1 * 4),
        ),
    )(att_row, w_conv, x_flat)

    return out_flat.reshape(n, c2, h, w)


# ---------------------------------------------------------------------------
# Plain-JAX reference mirroring the PyTorch module
# ---------------------------------------------------------------------------
def fsm_reference(x_nchw, w_atten, w_conv):
    pooled = jnp.mean(x_nchw, axis=(2, 3), keepdims=True)            # (N,C1,1,1)
    att = jax.nn.sigmoid(jnp.einsum('oc,nchw->nohw', w_atten, pooled))
    y = x_nchw + x_nchw * att
    return jnp.einsum('oc,nchw->nohw', w_conv, y)                    # (N,C2,H,W)


if __name__ == "__main__":
    N, C1, C2, H, W = 2, 4, 8, 16, 16

    key = jax.random.PRNGKey(0)
    kx, ka, kc = jax.random.split(key, 3)
    x = jax.random.normal(kx, (N, C1, H, W), dtype=jnp.float32)
    # synthetic 1x1 conv weights (PyTorch shape (out, in, 1, 1) squeezed)
    w_atten = jax.random.normal(ka, (C1, C1), dtype=jnp.float32) * 0.1
    w_conv = jax.random.normal(kc, (C2, C1), dtype=jnp.float32) * 0.1

    out = fsm_forward(x, w_atten, w_conv)
    out = jax.block_until_ready(out)

    ref = fsm_reference(x, w_atten, w_conv)
    assert out.shape == (N, C2, H, W)
    assert jnp.allclose(out, ref, atol=2e-5, rtol=2e-5), "mismatch vs reference"

    print("KERNEL_OK")
</pallas_src>

<mosaic_0001>
module attributes {stable_mosaic.version = 11 : i64} {
  func.func @_fsm_atten_kernel(%arg0: i32, %arg1: i32, %arg2: memref<1x4x256xf32, #tpu.memory_space<vmem>>, %arg3: memref<4x4xf32, #tpu.memory_space<vmem>>, %arg4: memref<1x4x1xf32, #tpu.memory_space<vmem>>, %arg5: memref<4x1xf32, #tpu.memory_space<vmem>>) attributes {dimension_semantics = [#tpu.dimension_semantics<parallel>, #tpu.dimension_semantics<arbitrary>], iteration_bounds = array<i64: 2, 1>, scalar_prefetch = 0 : i64, scratch_operands = 1 : i64, tpu.core_type = #tpu.core_type<tc>, window_params = [{transform_indices = @transform_0, window_bounds = array<i64: 1, 4, 256>}, {pipeline_mode = #tpu.pipeline_mode<synchronous>, transform_indices = @transform_1, window_bounds = array<i64: 4, 4>}, {transform_indices = @transform_2, window_bounds = array<i64: 1, 4, 1>}]} {
    %c0_i32 = arith.constant 0 : i32
    %0 = arith.cmpi eq, %arg1, %c0_i32 : i32
    %1 = arith.extui %0 : i1 to i32
    %c0_i32_0 = arith.constant 0 : i32
    %2 = arith.cmpi ne, %1, %c0_i32_0 : i32
    scf.if %2 {
      %cst_10 = arith.constant 0.000000e+00 : f32
      %13 = vector.broadcast %cst_10 : f32 to vector<4x1xf32>
      %c0_11 = arith.constant 0 : index
      %c0_12 = arith.constant 0 : index
      %14 = vector.load %arg5[%c0_11, %c0_12] : memref<4x1xf32, #tpu.memory_space<vmem>>, vector<4x1xf32>
      tpu.vector_store %arg5[%c0_11, %c0_12], %13 {strides = array<i32>} : memref<4x1xf32, #tpu.memory_space<vmem>>, vector<4x1xf32>,
    } else {
    }
    %c0 = arith.constant 0 : index
    %c0_1 = arith.constant 0 : index
    %c0_2 = arith.constant 0 : index
    %3 = vector.load %arg2[%c0, %c0_1, %c0_2] : memref<1x4x256xf32, #tpu.memory_space<vmem>>, vector<1x4x256xf32>
    %4 = vector.shape_cast %3 : vector<1x4x256xf32> to vector<4x256xf32>
    %cst = arith.constant 1.000000e+00 : f32
    %5 = vector.broadcast %cst : f32 to vector<256x1xf32>
    %c0_3 = arith.constant 0 : index
    %c0_4 = arith.constant 0 : index
    %6 = vector.load %arg5[%c0_3, %c0_4] : memref<4x1xf32, #tpu.memory_space<vmem>>, vector<4x1xf32>
    %cst_5 = arith.constant dense<0.000000e+00> : vector<4x1xf32>
    %7 = tpu.matmul %4, %5, %cst_5 {dimension_numbers = #tpu.dot_dimension_numbers<[1], [0], [0], [1], [0, 0, 1, 1], [], []>} : vector<4x256xf32>, vector<256x1xf32>, vector<4x1xf32> -> vector<4x1xf32>
    %8 = arith.addf %6, %7 : vector<4x1xf32>
    %c0_6 = arith.constant 0 : index
    %c0_7 = arith.constant 0 : index
    %9 = vector.load %arg5[%c0_6, %c0_7] : memref<4x1xf32, #tpu.memory_space<vmem>>, vector<4x1xf32>
    tpu.vector_store %arg5[%c0_6, %c0_7], %8 {strides = array<i32>} : memref<4x1xf32, #tpu.memory_space<vmem>>, vector<4x1xf32>,
    %c0_i32_8 = arith.constant 0 : i32
    %10 = arith.cmpi eq, %arg1, %c0_i32_8 : i32
    %11 = arith.extui %10 : i1 to i32
    %c0_i32_9 = arith.constant 0 : i32
    %12 = arith.cmpi ne, %11, %c0_i32_9 : i32
    scf.if %12 {
      %c0_10 = arith.constant 0 : index
      %c0_11 = arith.constant 0 : index
      %13 = vector.load %arg5[%c0_10, %c0_11] : memref<4x1xf32, #tpu.memory_space<vmem>>, vector<4x1xf32>
      %cst_12 = arith.constant 3.906250e-03 : f32
      %14 = vector.broadcast %cst_12 : f32 to vector<4x1xf32>
      %15 = arith.mulf %13, %14 : vector<4x1xf32>
      %c0_13 = arith.constant 0 : index
      %c0_14 = arith.constant 0 : index
      %16 = vector.load %arg3[%c0_13, %c0_14] : memref<4x4xf32, #tpu.memory_space<vmem>>, vector<4x4xf32>
      %cst_15 = arith.constant dense<0.000000e+00> : vector<4x1xf32>
      %17 = tpu.matmul %16, %15, %cst_15 {dimension_numbers = #tpu.dot_dimension_numbers<[1], [0], [0], [1], [0, 0, 1, 1], [], []>} : vector<4x4xf32>, vector<4x1xf32>, vector<4x1xf32> -> vector<4x1xf32>
      %18 = arith.negf %17 : vector<4x1xf32>
      %19 = math.exp %18 : vector<4x1xf32>
      %cst_16 = arith.constant 1.000000e+00 : f32
      %20 = vector.broadcast %cst_16 : f32 to vector<4x1xf32>
      %21 = arith.addf %20, %19 : vector<4x1xf32>
      %22 = arith.divf %20, %21 : vector<4x1xf32>
      %c0_17 = arith.constant 0 : index
      %c0_18 = arith.constant 0 : index
      %c0_19 = arith.constant 0 : index
      %23 = vector.load %arg4[%c0_17, %c0_18, %c0_19] : memref<1x4x1xf32, #tpu.memory_space<vmem>>, vector<1x4x1xf32>
      %24 = vector.shape_cast %23 : vector<1x4x1xf32> to vector<4x1xf32>
      %25 = vector.shape_cast %22 : vector<4x1xf32> to vector<1x4x1xf32>
      tpu.vector_store %arg4[%c0_17, %c0_18, %c0_19], %25 {strides = array<i32>} : memref<1x4x1xf32, #tpu.memory_space<vmem>>, vector<1x4x1xf32>,
    } else {
    }
    return
  }
  func.func @transform_0(%arg0: i32, %arg1: i32) -> (i32, i32, i32) {
    %c0_i32 = arith.constant 0 : i32
    %c0_i32_0 = arith.constant 0 : i32
    return %arg0, %c0_i32, %arg1 : i32, i32, i32
  }
  func.func @transform_1(%arg0: i32, %arg1: i32) -> (i32, i32) {
    %c0_i32 = arith.constant 0 : i32
    %c0_i32_0 = arith.constant 0 : i32
    %c0_i32_1 = arith.constant 0 : i32
    return %c0_i32, %c0_i32_0 : i32, i32
  }
  func.func @transform_2(%arg0: i32, %arg1: i32) -> (i32, i32, i32) {
    %c0_i32 = arith.constant 0 : i32
    %c0_i32_0 = arith.constant 0 : i32
    %c0_i32_1 = arith.constant 0 : i32
    return %arg0, %c0_i32, %c0_i32_0 : i32, i32, i32
  }
}

</mosaic_0001>

<llo_original>
// kernel: tpu_custom_call.1
$region0: #{tpu_custom_call.1}
  #allocation0 [shape = 'u32[]', space=smem, size = 0x4, offset = 0x4, fixed_abs, tag = 'smem constant byte address 0x4 - core index']
  #allocation1 [shape = 'u32[72,128]{1,0:T(1,128)}', space=vmem, size = 0x9000, scoped, tag = 'internal scratch']
  #allocation2 [shape = 'f32[4,1]{1,0:T(4,128)}', space=vmem, size = 0x800, scoped, tag = 'scratch operand']
  %s0 = inlined_call_operand.hbm [shape: f32[2,4,256], index: 0, kind: input, shape index: {}]
  %s1 = inlined_call_operand.hbm [shape: f32[4,4], index: 1, kind: input, shape index: {}]
  %s2 = inlined_call_operand.vmem [shape: f32[2,4,1], index: 2, kind: output, shape index: {}]
  %s3 = sld [smem:[#allocation0]]
  $region57: #{tpu_custom_call.1} parent=0
    _
  %s5 = ssub.s32 1, %s3
  %s6 = scalar_select 0, %s5, %s3
  $region1: #{tpu_custom_call.1} parent=0
    #allocation3 [shape = 'u8[8192]{0}', space=vmem, size = 0x2000, scoped, tag = 'input window, operand 0']
    #allocation4 [shape = 's32[2]{0}', space=sflag, size = 0x8, scoped, tag = 'scoped memory for tpu_custom_call.1']
    #allocation5 [shape = 'u8[2048]{0}', space=vmem, size = 0x800, scoped, tag = 'input window, operand 1, single buffered']
    #allocation6 [shape = 's32[1]{0}', space=sflag, size = 0x4, scoped, tag = 'scoped memory for tpu_custom_call.1']
    %7 = vsyncpa [#allocation4], 0
    %s8 = scalar_lea.sflag [#allocation4], 1
    %9 = vsyncpa %s8, 0
    %10 = vsyncpa [#allocation6], 0
    loop: start=0, step=1, limit=4
    $region2: #{tpu_custom_call.1} parent=1 // loop_pre_header
      _
    $region3: #{tpu_custom_call.1} parent=1 // loop_header
      %s12 = sphi 0, %s16
      %p13 = scmp.ge.s32.totalorder %s12, 4
      %s19 = sphi 0, %s31
      %s20 = sphi 0, %s27
      %s21 = sphi 0, %s19
      %s22 = sphi 0, %s20
      %s23 = sphi 0, %s21
      %s24 = sphi 0, %s22
      %s36 = sphi 0, %s38
      %s39 = sphi 0, %s36
      %s40 = sphi 0, %s39
      %s56 = sphi 0, %s40
      %s60 = sphi 0, %s60
      %s62 = sphi 0, %s60
      %s63 = sphi 0, %s62
      %s77 = sphi 0, %s63
      %s83 = sphi 0, %s85
      %s86 = sphi 0, %s83
      %s87 = sphi 0, %s86
      %s103 = sphi 0, %s87
    $region4: #{tpu_custom_call.1} parent=1 // loop_header_branch
      %15 = sbr.rel (%p13) target = $region8
    $region5: #{tpu_custom_call.1} parent=1 // loop_body
      %s17 = ssub.s32 %s12, 1
      %s18 = ssub.s32 %s12, 2
      %s25 = sadd.s32 1, %s20
      %p26 = scmp.ge.s32.totalorder %s25, 1
      %s27 = scalar_select %p26, 0, %s25
      %s28 = sadd.s32 1, %s19
      %s29 = scalar_select %p26, %s28, %s19
      %p30 = scmp.ge.s32.totalorder %s29, 2
      %s31 = scalar_select %p30, 0, %s29
      %s32 = ssub.s32 %s19, %s31
      %s33 = ssub.s32 %s20, %s27
      %s34 = sor.u32 %s32, %s33
      %p35 = scmp.eq.s32.totalorder %s34, 0
      %s37 = sadd.s32 %s36, 1
      %s38 = scalar_select %p35, %s36, %s37
      %p41 = pneg %p35
      %p42 = scmp.eq.s32.totalorder %s12, 1
      %p43 = por %p41, %p42
      %p44 = scmp.ne.s32.totalorder %s36, %s39
      %p45 = scmp.eq.s32.totalorder %s12, 0
      %p46 = por %p44, %p45
      %p47 = scmp.ne.s32.totalorder %s36, %s39
      %p48 = scmp.eq.s32.totalorder %s17, 1
      %p49 = por %p47, %p48
      %p50 = scmp.ne.s32.totalorder %s39, %s40
      %p51 = scmp.eq.s32.totalorder %s17, 0
      %p52 = por %p50, %p51
      %p53 = scmp.ne.s32.totalorder %s39, %s40
      %p54 = scmp.eq.s32.totalorder %s18, 1
      %p55 = por %p53, %p54
      %p57 = scmp.ne.s32.totalorder %s40, %s56
      %p58 = scmp.eq.s32.totalorder %s18, 0
      %p59 = por %p57, %p58
      %s61 = sadd.s32 %s60, 1
      %p64 = scmp.eq.s32.totalorder %s12, 1
      %p65 = scmp.ne.s32.totalorder %s60, %s62
      %p66 = scmp.eq.s32.totalorder %s12, 0
      %p67 = por %p65, %p66
      %p68 = scmp.ne.s32.totalorder %s60, %s62
      %p69 = scmp.eq.s32.totalorder %s17, 1
      %p70 = por %p68, %p69
      %p71 = scmp.ne.s32.totalorder %s62, %s63
      %p72 = scmp.eq.s32.totalorder %s17, 0
      %p73 = por %p71, %p72
      %p74 = scmp.ne.s32.totalorder %s62, %s63
      %p75 = scmp.eq.s32.totalorder %s18, 1
      %p76 = por %p74, %p75
      %p78 = scmp.ne.s32.totalorder %s63, %s77
      %p79 = scmp.eq.s32.totalorder %s18, 0
      %p80 = por %p78, %p79
      %s81 = ssub.s32 %s19, %s31
      %p82 = scmp.eq.s32.totalorder %s81, 0
      %s84 = sadd.s32 %s83, 1
      %s85 = scalar_select %p82, %s83, %s84
      %p88 = pneg %p82
      %p89 = scmp.eq.s32.totalorder %s12, 1
      %p90 = por %p88, %p89
      %p91 = scmp.ne.s32.totalorder %s83, %s86
      %p92 = scmp.eq.s32.totalorder %s12, 0
      %p93 = por %p91, %p92
      %p94 = scmp.ne.s32.totalorder %s83, %s86
      %p95 = scmp.eq.s32.totalorder %s17, 1
      %p96 = por %p94, %p95
      %p97 = scmp.ne.s32.totalorder %s86, %s87
      %p98 = scmp.eq.s32.totalorder %s17, 0
      %p99 = por %p97, %p98
      %p100 = scmp.ne.s32.totalorder %s86, %s87
      %p101 = scmp.eq.s32.totalorder %s18, 1
      %p102 = por %p100, %p101
      %p104 = scmp.ne.s32.totalorder %s87, %s103
      %p105 = scmp.eq.s32.totalorder %s18, 0
      %p106 = por %p104, %p105
      %p107 = scmp.le.s32.totalorder 1, %s12
      %p108 = scmp.lt.s32.totalorder %s12, 3
      %p109 = pnand %p107, %p108
      %p110 = pneg %p109
      // Predicated region
      $region9: #{tpu_custom_call.1} parent=5 // pred_check
        _
      $region10: #{tpu_custom_call.1} parent=5 // pred_check_branch
        %112 = sbr.rel (%p109) target = $region12
      $region11: #{tpu_custom_call.1} parent=5 // pred_region
        %s113 = ssub.s32 %s12, 1
        // Predicated region
        $region13: #{tpu_custom_call.1} parent=11 // pred_check
          %p114 = pneg %p73
        $region14: #{tpu_custom_call.1} parent=11 // pred_check_branch
          %116 = sbr.rel (%p114) target = $region16
        $region15: #{tpu_custom_call.1} parent=11 // pred_region
          %118 = vsyncadd [#allocation6], 0
          %s120 = sshll.u32 %s1, 4
          %s121 = int_to_ptr.hbm [resolvable:$true] %s120
          %s122 = sshll.u32 [#allocation5], 4
          %s123 = int_to_ptr.vmem [resolvable:$true] %s122
          %125 = dma.hbm_to_vmem [thread:$0]  %s121, 64, %s123, [#allocation6]
        $region16: #{tpu_custom_call.1} parent=11 // pred_fallthru
          _
      $region12: #{tpu_custom_call.1} parent=5 // pred_fallthru
        _
      %p126 = scmp.lt.s32.totalorder %s12, 2
      // Predicated region
      $region17: #{tpu_custom_call.1} parent=5 // pred_check
        %p127 = pneg %p126
      $region18: #{tpu_custom_call.1} parent=5 // pred_check_branch
        %129 = sbr.rel (%p127) target = $region20
      $region19: #{tpu_custom_call.1} parent=5 // pred_region
        // Predicated region
        $region21: #{tpu_custom_call.1} parent=19 // pred_check
          %p130 = pneg %p46
        $region22: #{tpu_custom_call.1} parent=19 // pred_check_branch
          %132 = sbr.rel (%p130) target = $region24
        $region23: #{tpu_custom_call.1} parent=19 // pred_region
          %s133 = sand.u32 %s36, 1
          %s134 = scalar_lea.sflag [#allocation4], %s133
          %s135 = sand.u32 %s36, 1
          %s136 = smul.addr %s135, 8
          %s137 = scalar_lea.vmem [#allocation3], %s136
          %s138 = smul.u32 2, %s20
          %140 = vsyncadd %s134, 0
          %s141 = smul.addr %s19, 2
          %s142 = sadd.s32 %s138, %s141
          %s143 = smul.addr %s142, 4
          %s144 = scalar_lea.hbm %s0, %s143
          %s146 = sshll.u32 %s144, 4
          %s147 = int_to_ptr.hbm [resolvable:$true] %s146
          %s148 = sshll.u32 %s137, 4
          %s149 = int_to_ptr.vmem [resolvable:$true] %s148
          %151 = dma.hbm_to_vmem [thread:$0]  %s147, 128, %s149, %s134
        $region24: #{tpu_custom_call.1} parent=19 // pred_fallthru
          _
      $region20: #{tpu_custom_call.1} parent=5 // pred_fallthru
        _
      %p152 = scmp.le.s32.totalorder 1, %s12
      %p153 = scmp.lt.s32.totalorder %s12, 3
      %p154 = pnand %p152, %p153
      %p155 = pneg %p154
      // Predicated region
      $region25: #{tpu_custom_call.1} parent=5 // pred_check
        _
      $region26: #{tpu_custom_call.1} parent=5 // pred_check_branch
        %157 = sbr.rel (%p154) target = $region28
      $region27: #{tpu_custom_call.1} parent=5 // pred_region
        %s158 = ssub.s32 %s12, 1
        %s159 = sand.u32 %s39, 1
        %s160 = scalar_lea.sflag [#allocation4], %s159
        %s161 = sand.u32 %s39, 1
        %s162 = smul.addr %s161, 8
        %s163 = scalar_lea.vmem [#allocation3], %s162
        // Predicated region
        $region29: #{tpu_custom_call.1} parent=27 // pred_check
          %p164 = pneg %p52
        $region30: #{tpu_custom_call.1} parent=27 // pred_check_branch
          %166 = sbr.rel (%p164) target = $region32
        $region31: #{tpu_custom_call.1} parent=27 // pred_region
          %168 = dma.done %s160, 128
        $region32: #{tpu_custom_call.1} parent=27 // pred_fallthru
          _
        // Predicated region
        $region33: #{tpu_custom_call.1} parent=27 // pred_check
          %p169 = pneg %p73
        $region34: #{tpu_custom_call.1} parent=27 // pred_check_branch
          %171 = sbr.rel (%p169) target = $region36
        $region35: #{tpu_custom_call.1} parent=27 // pred_region
          %173 = dma.done [#allocation6], 64
        $region36: #{tpu_custom_call.1} parent=27 // pred_fallthru
          _
        %s174 = sand.u32 %s39, 1
        %s175 = scalar_lea.sflag [#allocation4], %s174
        %s176 = sand.u32 %s39, 1
        %s177 = smul.addr %s176, 8
        %s178 = scalar_lea.vmem [#allocation3], %s177
        %p179 = pneg %p52
        %p180 = pneg %p49
        %p181 = pneg %p73
        %p182 = pneg %p70
        %p183 = pneg %p99
        %p184 = pneg %p96
        %p185 = scmp.lt.s32.totalorder %s21, 1
        %s186 = scalar_select %p185, %s21, 1
        %s187 = smul.addr %s186, 4
        %s188 = scalar_lea.vmem %s2, %s187
        %s189 = smul.u32 2, %s22
        %p190 = scmp.lt.s32.totalorder %s21, 1
        %s191 = scalar_select %p190, %s21, 1
        %s192 = smul.addr %s191, 4
        %s193 = scalar_lea.vmem %s2, %s192
        %p194 = scmp.eq.s32.totalorder %s22, 0
        // Predicated region
        $region37: #{tpu_custom_call.1} parent=27 // pred_check
          %p195 = pneg %p194
        $region38: #{tpu_custom_call.1} parent=27 // pred_check_branch
          %197 = sbr.rel (%p195) target = $region40
        $region39: #{tpu_custom_call.1} parent=27 // pred_region
          %vm198 = vcmask 3072
          %199 = vst.msk [vmem:[#allocation2] sm:$0xf] %vm198, 0.0
        $region40: #{tpu_custom_call.1} parent=27 // pred_fallthru
          _
        %v200 = vld [vmem:[%s163] sm:$0xff]
        %v201 = vld [vmem:[#allocation2] sm:$0xf]
        %203 = vst [vmem:[#allocation1] ss:$2 sm:$0xff] %v200
        %v204 = vld.sshfl [vmem:[#allocation1] sm:$0xff pattern:$0x75316420]
        %v205 = vld.sshfl [vmem:[#allocation1 + $0x8] sm:$0xff pattern:$0x75316420]
        %208 = vmatpush.msra.mxu0 1.0
        %209 = vmatpush.msra.mxu0 1.0
        %210 = vmatpush.msra.mxu0 1.0
        %211 = vmatpush.msra.mxu0 1.0
        %212 = vmatpush.msra.mxu0 1.0
        %213 = vmatpush.msra.mxu0 1.0
        %214 = vmatpush.msra.mxu0 1.0
        %215 = vmatpush.msra.mxu0 1.0
        %216 = vmatpush.msra.mxu0 1.0
        %217 = vmatpush.msra.mxu0 1.0
        %218 = vmatpush.msra.mxu0 1.0
        %219 = vmatpush.msra.mxu0 1.0
        %220 = vmatpush.msra.mxu0 1.0
        %221 = vmatpush.msra.mxu0 1.0
        %222 = vmatpush.msra.mxu0 1.0
        %223 = vmatpush.msra.mxu0 1.0
        %224 = vmatmul.f32.gmra.mxu0 %v204
        %v225 = vpop.f32.mrf.mxu0
        %v226 = vadd.f32 0.0, %v225
        %227 = vdwg.mxu0
        %228 = vmatpush.msra.mxu0 1.0
        %229 = vmatpush.msra.mxu0 1.0
        %230 = vmatpush.msra.mxu0 1.0
        %231 = vmatpush.msra.mxu0 1.0
        %232 = vmatpush.msra.mxu0 1.0
        %233 = vmatpush.msra.mxu0 1.0
        %234 = vmatpush.msra.mxu0 1.0
        %235 = vmatpush.msra.mxu0 1.0
        %236 = vmatpush.msra.mxu0 1.0
        %237 = vmatpush.msra.mxu0 1.0
        %238 = vmatpush.msra.mxu0 1.0
        %239 = vmatpush.msra.mxu0 1.0
        %240 = vmatpush.msra.mxu0 1.0
        %241 = vmatpush.msra.mxu0 1.0
        %242 = vmatpush.msra.mxu0 1.0
        %243 = vmatpush.msra.mxu0 1.0
        %244 = vmatmul.f32.gmra.mxu0 %v205
        %v245 = vpop.f32.mrf.mxu0
        %v246 = vadd.f32 %v226, %v245
        %247 = vdwg.mxu0
        %v248 = vadd.f32 %v201, %v246
        %vm249 = vcmask 3072
        %250 = vst.msk [vmem:[#allocation2] sm:$0xf] %vm249, %v248
        // Predicated region
        $region41: #{tpu_custom_call.1} parent=27 // pred_check
          %p251 = pneg %p194
        $region42: #{tpu_custom_call.1} parent=27 // pred_check_branch
          %253 = sbr.rel (%p251) target = $region44
        $region43: #{tpu_custom_call.1} parent=27 // pred_region
          %v254 = vld [vmem:[#allocation2] sm:$0xf]
          %v255 = vmul.f32 %v254, 0.00390625
          %v256 = vld [vmem:[#allocation5] sm:$0xf]
          %vm257 = vcmask 31744
          %v259 = vsel %vm257, %v256, 0
          %vm261 = vcmask 1043456
          %v263 = vsel %vm261, %v255, 0
          %265 = vmatpush.msra.mxu0 0.0
          %266 = vmatpush.msra.mxu0 0.0
          %267 = vmatpush.msra.mxu0 0.0
          %268 = vmatpush.msra.mxu0 0.0
          %269 = vmatpush.msra.mxu0 0.0
          %270 = vmatpush.msra.mxu0 0.0
          %271 = vmatpush.msra.mxu0 0.0
          %272 = vmatpush.msra.mxu0 0.0
          %273 = vmatpush.msra.mxu0 0.0
          %274 = vmatpush.msra.mxu0 0.0
          %275 = vmatpush.msra.mxu0 0.0
          %276 = vmatpush.msra.mxu0 0.0
          %277 = vmatpush.msra.mxu0 0.0
          %278 = vmatpush.msra.mxu0 0.0
          %279 = vmatpush.msra.mxu0 0.0
          %280 = vmatpush.msra.mxu0 %v263
          %281 = vmatmul.f32.gmra.mxu0 %v259
          %v282 = vpop.f32.mrf.mxu0
          %v283 = vadd.f32 0.0, %v282
          %284 = vdwg.mxu0
          %v285 = vxor.u32 %v283, 2147483648
          %v286 = vmul.f32 %v285, 1.442695
          %v287 = vpow.pop %v286
          %v288 = vadd.f32 %v287, 1.0
          %v289 = vrcp.pop %v288
          %v290 = vmul.f32 %v288, %v289
          %v291 = vsub.f32 1.0, %v290
          %v292 = vmul.f32 %v289, %v291
          %v293 = vadd.f32 %v289, %v292
          %vm294 = vweird.f32 %v288
          %vm295 = vweird.f32 %v289
          %vm296 = vmor %vm294, %vm295
          %v297 = vsel %vm296, %v289, %v293
          %v298 = vand.u32 2147483647, %v288
          %vm299 = vcmp.eq.f32.partialorder %v298, 8.507059e+37
          %v300 = vand.u32 %v288, 2147483648
          %v301 = vor.u32 1.1754944e-38, %v300
          %v302 = vsel %vm299, %v301, %v297
          %v303 = vmul.f32 1.0, %v302
          %304 = vst.msk [vmem:[%s193] sm:$0xf] %vm249, %v303
        $region44: #{tpu_custom_call.1} parent=27 // pred_fallthru
          _
        %p305 = scmp.lt.s32.totalorder %s21, 1
        %s306 = scalar_select %p305, %s21, 1
        %s307 = smul.addr %s306, 4
        %s308 = scalar_lea.vmem %s2, %s307
        // Predicated region
        $region45: #{tpu_custom_call.1} parent=27 // pred_check
          %p309 = pneg %p96
        $region46: #{tpu_custom_call.1} parent=27 // pred_check_branch
          %311 = sbr.rel (%p309) target = $region48
        $region47: #{tpu_custom_call.1} parent=27 // pred_region
          _
        $region48: #{tpu_custom_call.1} parent=27 // pred_fallthru
          _
      $region28: #{tpu_custom_call.1} parent=5 // pred_fallthru
        _
      %p312 = scmp.le.s32.totalorder 2, %s12
      // Predicated region
      $region49: #{tpu_custom_call.1} parent=5 // pred_check
        %p313 = pneg %p312
      $region50: #{tpu_custom_call.1} parent=5 // pred_check_branch
        %315 = sbr.rel (%p313) target = $region52
      $region51: #{tpu_custom_call.1} parent=5 // pred_region
        %s316 = ssub.s32 %s12, 2
        // Predicated region
        $region53: #{tpu_custom_call.1} parent=51 // pred_check
          %p317 = pneg %p102
        $region54: #{tpu_custom_call.1} parent=51 // pred_check_branch
          %319 = sbr.rel (%p317) target = $region56
        $region55: #{tpu_custom_call.1} parent=51 // pred_region
          %p320 = scmp.lt.s32.totalorder %s23, 1
          %s321 = scalar_select %p320, %s23, 1
          %s322 = smul.addr %s321, 4
          %s323 = scalar_lea.vmem %s2, %s322
        $region56: #{tpu_custom_call.1} parent=51 // pred_fallthru
          _
      $region52: #{tpu_custom_call.1} parent=5 // pred_fallthru
        _
    $region6: #{tpu_custom_call.1} parent=1 // loop_footer
      %s16 = sadd.s32 1, %s12
    $region7: #{tpu_custom_call.1} parent=1 // loop_footer_branch
      %11 = sbr.rel target = $region3
    $region8: #{tpu_custom_call.1} parent=1 // loop_exit
      _
    %324 = vsyncpa [#allocation4], 1
    %s325 = scalar_lea.sflag [#allocation4], 1
    %326 = vsyncpa %s325, 1
    %327 = vsyncpa [#allocation6], 1

</llo_original>
